<compile_context>
chip_gen: v6e
topology: v6e:2x2x1
jax: 0.10.0
libtpu: 0.0.40
codegen_flags: <defaults>
</compile_context>

<pallas_src>
from typing import NamedTuple, Optional

import jax
import jax.numpy as jnp
from jax.experimental import pallas as pl
from jax.experimental.pallas import tpu as pltpu


# --------------------------------------------------------------------------- #
# Kernels
# --------------------------------------------------------------------------- #
def _fc_kernel_f32(x_ref, w_ref, b_ref, o_ref):
    """f32 output: accumulate directly into o_ref (VMEM-resident over k)."""
    k = pl.program_id(2)
    part = jnp.dot(x_ref[...].astype(w_ref.dtype), w_ref[...],
                   preferred_element_type=jnp.float32)

    @pl.when(k == 0)
    def _():
        o_ref[...] = part                      # direct write, no zero-init pass

    @pl.when(k > 0)
    def _():
        o_ref[...] += part

    @pl.when(k == pl.num_programs(2) - 1)
    def _():
        acc = o_ref[...] + b_ref[...]          # bias pre-scaled by b_lrmul, f32
        o_ref[...] = jnp.where(acc >= 0, acc, jnp.float32(0.2) * acc)


def _fc_kernel_scratch(x_ref, w_ref, b_ref, o_ref, acc_ref):
    """Sub-f32 output: f32 VMEM scratch accumulator, cast on finalize."""
    k = pl.program_id(2)
    part = jnp.dot(x_ref[...].astype(w_ref.dtype), w_ref[...],
                   preferred_element_type=jnp.float32)

    @pl.when(k == 0)
    def _():
        acc_ref[...] = part

    @pl.when(k > 0)
    def _():
        acc_ref[...] += part

    @pl.when(k == pl.num_programs(2) - 1)
    def _():
        acc = acc_ref[...] + b_ref[...]
        o_ref[...] = jnp.where(acc >= 0, acc,
                               jnp.float32(0.2) * acc).astype(o_ref.dtype)


# --------------------------------------------------------------------------- #
# Parameter preparation (one-time, off the hot path)
# --------------------------------------------------------------------------- #
def _round_up(v, m):
    return ((v + m - 1) // m) * m


def _divisor_tile(dim_p, cap):
    """Largest multiple of 128 that is <= cap and divides dim_p (dim_p % 128 == 0)."""
    t = max(128, (min(cap, dim_p) // 128) * 128)
    while dim_p % t != 0:
        t -= 128
    return t


class FCParams(NamedTuple):
    w_t: jax.Array          # (Cin_p, Cout_p) = (W * w_lrmul)^T, zero-padded, compute dtype
    bias: jax.Array         # (1, Cout_p)     = bias * b_lrmul, zero-padded, float32
    in_channels: int
    out_channels: int


def fc_prepare(weight, bias=None, *, w_lrmul=1.0, b_lrmul=1.0,
               compute_dtype: Optional[jnp.dtype] = None) -> FCParams:
    """Scale / pad / transpose the weight ONCE (call at init time, not per forward).

    weight: (Cout, Cin) torch layout, bias: (Cout,) or None.
    compute_dtype=jnp.bfloat16 halves weight HBM traffic; accumulation stays f32.
    """
    Cout, Cin = weight.shape
    cdtype = jnp.dtype(compute_dtype) if compute_dtype is not None else jnp.dtype(weight.dtype)
    Cin_p = _round_up(Cin, 128)
    Cout_p = _round_up(Cout, 128)

    w = weight.astype(jnp.float32) * jnp.float32(w_lrmul)          # scale in f32
    w = jnp.pad(w, ((0, Cout_p - Cout), (0, Cin_p - Cin)))
    w_t = jnp.asarray(w.T, dtype=cdtype)                           # (Cin_p, Cout_p) in HBM

    if bias is None:
        b = jnp.zeros((Cout_p,), jnp.float32)
    else:
        b = jnp.pad(bias.astype(jnp.float32) * jnp.float32(b_lrmul), (0, Cout_p - Cout))
    return FCParams(w_t=w_t, bias=b.reshape(1, Cout_p),
                    in_channels=Cin, out_channels=Cout)


# --------------------------------------------------------------------------- #
# Forward
# --------------------------------------------------------------------------- #
def fc_apply(params: FCParams, x):
    """out = leaky_relu(x @ (W*w_lrmul)^T + bias*b_lrmul, 0.2) with prepared params."""
    B, Cin = x.shape
    assert Cin == params.in_channels, "weight/input channel mismatch"
    Cout = params.out_channels
    Kp, Np = params.w_t.shape
    cdtype = params.w_t.dtype
    out_dtype = x.dtype

    x_sz = jnp.dtype(x.dtype).itemsize
    w_sz = jnp.dtype(cdtype).itemsize
    o_sz = jnp.dtype(out_dtype).itemsize

    # ---- tile selection -----------------------------------------------------
    sub = 8 if x_sz >= 4 else 16                     # bf16 activations pack (16,128)
    tm_cap = 512 if B >= 512 else 256                # grow tm before tn: weight re-reads ~ Bp/tm
    n_row_blocks = -(-B // tm_cap)
    tm = _round_up(-(-B // n_row_blocks), sub)
    Bp = _round_up(B, tm)

    tn = _divisor_tile(Np, 1024)
    tk = _divisor_tile(Kp, 1024)

    # v7x megacore: guarantee >= 2 blocks on the parallel sub-grid when possible.
    if (Bp // tm) * (Np // tn) < 2 and Np > 128:
        tn = _divisor_tile(Np, max(128, tn // 2))

    grid = (Bp // tm, Np // tn, Kp // tk)

    # ---- x padding only when actually required (weight/bias padded in prepare) ----
    if (Bp, Kp) != x.shape:
        x_in = jnp.pad(x, ((0, Bp - B), (0, Kp - Cin)))
    else:
        x_in = x

    use_scratch = out_dtype != jnp.float32
    kernel = _fc_kernel_scratch if use_scratch else _fc_kernel_f32
    scratch = [pltpu.VMEM((tm, tn), jnp.float32)] if use_scratch else []

    # ---- VMEM budget (double-buffered tiles) & scheduler cost hint ----------
    vmem_est = (2 * tm * tk * x_sz + 2 * tk * tn * w_sz
                + 2 * tm * tn * o_sz + 2 * tn * 4
                + (tm * tn * 4 if use_scratch else 0))
    vmem_limit = int(min(48 * 1024 * 1024, max(32 * 1024 * 1024, 2 * vmem_est)))

    cost = pl.CostEstimate(
        flops=2 * Bp * Kp * Np,
        transcendentals=0,
        bytes_accessed=(x_sz * Bp * Kp * (Np // tn)      # x re-read per column block
                        + w_sz * Kp * Np * (Bp // tm)    # weight re-read per row block
                        + 4 * Np * (Bp // tm)            # bias
                        + o_sz * Bp * Np))               # output write

    out_p = pl.pallas_call(
        kernel,
        out_shape=jax.ShapeDtypeStruct((Bp, Np), out_dtype),
        grid_spec=pltpu.PrefetchScalarGridSpec(
            num_scalar_prefetch=0,
            grid=grid,
            in_specs=[
                pl.BlockSpec((tm, tk), lambda i, j, k: (i, k)),   # x tile
                pl.BlockSpec((tk, tn), lambda i, j, k: (k, j)),   # (W*lrmul)^T tile
                pl.BlockSpec((1, tn), lambda i, j, k: (0, j)),    # bias tile
            ],
            out_specs=pl.BlockSpec((tm, tn), lambda i, j, k: (i, j)),
            scratch_shapes=scratch,
        ),
        compiler_params=pltpu.CompilerParams(
            dimension_semantics=("parallel", "parallel", "arbitrary"),
            vmem_limit_bytes=vmem_limit),
        cost_estimate=cost,
    )(x_in, params.w_t, params.bias)

    return out_p[:B, :Cout]


def fc_forward(x, weight, bias=None, *, w_lrmul=1.0, b_lrmul=1.0, compute_dtype=None):
    """One-shot convenience wrapper. For repeated calls, fc_prepare once + fc_apply."""
    return fc_apply(
        fc_prepare(weight, bias, w_lrmul=w_lrmul, b_lrmul=b_lrmul,
                   compute_dtype=compute_dtype), x)


# --------------------------------------------------------------------------- #
# Reference / init helpers
# --------------------------------------------------------------------------- #
def make_fc_params(key, in_channels, out_channels, gain=2 ** 0.5,
                   use_wscale=False, lrmul=1.0):
    """Deterministic parameter init mirroring FC.__init__."""
    he_std = gain * in_channels ** (-0.5)
    if use_wscale:
        init_std = 1.0 / lrmul
        w_lrmul = he_std * lrmul
    else:
        init_std = he_std / lrmul
        w_lrmul = lrmul
    weight = jax.random.normal(key, (out_channels, in_channels),
                               dtype=jnp.float32) * init_std
    bias = jnp.zeros((out_channels,), dtype=jnp.float32)
    b_lrmul = lrmul
    return weight, bias, w_lrmul, b_lrmul


def fc_reference(x, weight, bias, *, w_lrmul, b_lrmul):
    out = x @ (weight * w_lrmul).T + bias * b_lrmul
    return jnp.where(out >= 0, out, 0.2 * out)


# --------------------------------------------------------------------------- #
# Self-test
# --------------------------------------------------------------------------- #
if __name__ == "__main__":
    key = jax.random.PRNGKey(0)
    k_x, k_w = jax.random.split(key)

    batch, in_channels, out_channels = 8, 32, 64
    x = jax.random.normal(k_x, (batch, in_channels), dtype=jnp.float32)

    weight, bias, w_lrmul, b_lrmul = make_fc_params(
        k_w, in_channels, out_channels, gain=2 ** 0.5, use_wscale=True, lrmul=1.0)

    ref = fc_reference(x, weight, bias, w_lrmul=w_lrmul, b_lrmul=b_lrmul)

    # 1) f32 weight streaming (numerically matches the reference).
    params_f32 = fc_prepare(weight, bias, w_lrmul=w_lrmul, b_lrmul=b_lrmul)
    out = jax.block_until_ready(fc_apply(params_f32, x))
    assert out.shape == (batch, out_channels)
    assert jnp.allclose(out, ref, atol=1e-5, rtol=1e-5), "f32 mismatch vs reference"

    # 2) bf16 weight streaming, f32 accumulation / epilogue (production config).
    params_bf16 = fc_prepare(weight, bias, w_lrmul=w_lrmul, b_lrmul=b_lrmul,
                             compute_dtype=jnp.bfloat16)
    out_bf16 = jax.block_until_ready(fc_apply(params_bf16, x))
    assert out_bf16.dtype == jnp.float32
    assert jnp.allclose(out_bf16, ref, atol=5e-2, rtol=5e-2), "bf16-weight mismatch"

    # 3) bf16 activations + bf16 output: exercises the scratch-accumulator kernel.
    out_lp = jax.block_until_ready(fc_apply(params_bf16, x.astype(jnp.bfloat16)))
    assert out_lp.dtype == jnp.bfloat16
    assert jnp.allclose(out_lp.astype(jnp.float32), ref, atol=1e-1, rtol=1e-1), \
        "bf16-activation mismatch"

    print("KERNEL_OK")
</pallas_src>

<mosaic_0001>
module attributes {stable_mosaic.version = 11 : i64} {
  func.func @_fc_kernel_f32(%arg0: i32, %arg1: i32, %arg2: i32, %arg3: memref<8x128xf32, #tpu.memory_space<vmem>>, %arg4: memref<128x128xf32, #tpu.memory_space<vmem>>, %arg5: memref<1x128xf32, #tpu.memory_space<vmem>>, %arg6: memref<8x128xf32, #tpu.memory_space<vmem>>) attributes {dimension_semantics = [#tpu.dimension_semantics<parallel>, #tpu.dimension_semantics<parallel>, #tpu.dimension_semantics<arbitrary>], iteration_bounds = array<i64: 1, 1, 1>, scalar_prefetch = 0 : i64, scratch_operands = 0 : i64, tpu.core_type = #tpu.core_type<tc>, window_params = [{transform_indices = @transform_0, window_bounds = array<i64: 8, 128>}, {transform_indices = @transform_1, window_bounds = array<i64: 128, 128>}, {transform_indices = @transform_2, window_bounds = array<i64: 1, 128>}, {transform_indices = @transform_3, window_bounds = array<i64: 8, 128>}]} {
    %c0 = arith.constant 0 : index
    %c0_0 = arith.constant 0 : index
    %0 = vector.load %arg3[%c0, %c0_0] : memref<8x128xf32, #tpu.memory_space<vmem>>, vector<8x128xf32>
    %c0_1 = arith.constant 0 : index
    %c0_2 = arith.constant 0 : index
    %1 = vector.load %arg4[%c0_1, %c0_2] : memref<128x128xf32, #tpu.memory_space<vmem>>, vector<128x128xf32>
    %cst = arith.constant dense<0.000000e+00> : vector<8x128xf32>
    %2 = tpu.matmul %0, %1, %cst {dimension_numbers = #tpu.dot_dimension_numbers<[1], [0], [0], [1], [0, 0, 1, 1], [], []>} : vector<8x128xf32>, vector<128x128xf32>, vector<8x128xf32> -> vector<8x128xf32>
    %c0_i32 = arith.constant 0 : i32
    %3 = arith.cmpi eq, %arg2, %c0_i32 : i32
    %4 = arith.extui %3 : i1 to i32
    %c0_i32_3 = arith.constant 0 : i32
    %5 = arith.cmpi ne, %4, %c0_i32_3 : i32
    scf.if %5 {
      %c0_8 = arith.constant 0 : index
      %c0_9 = arith.constant 0 : index
      %12 = vector.load %arg6[%c0_8, %c0_9] : memref<8x128xf32, #tpu.memory_space<vmem>>, vector<8x128xf32>
      tpu.vector_store %arg6[%c0_8, %c0_9], %2 {strides = array<i32>} : memref<8x128xf32, #tpu.memory_space<vmem>>, vector<8x128xf32>,
    } else {
    }
    %c0_i32_4 = arith.constant 0 : i32
    %6 = arith.cmpi sgt, %arg2, %c0_i32_4 : i32
    %7 = arith.extui %6 : i1 to i32
    %c0_i32_5 = arith.constant 0 : i32
    %8 = arith.cmpi ne, %7, %c0_i32_5 : i32
    scf.if %8 {
      %c0_8 = arith.constant 0 : index
      %c0_9 = arith.constant 0 : index
      %12 = vector.load %arg6[%c0_8, %c0_9] : memref<8x128xf32, #tpu.memory_space<vmem>>, vector<8x128xf32>
      %13 = arith.addf %12, %2 : vector<8x128xf32>
      %c0_10 = arith.constant 0 : index
      %c0_11 = arith.constant 0 : index
      %14 = vector.load %arg6[%c0_10, %c0_11] : memref<8x128xf32, #tpu.memory_space<vmem>>, vector<8x128xf32>
      tpu.vector_store %arg6[%c0_10, %c0_11], %13 {strides = array<i32>} : memref<8x128xf32, #tpu.memory_space<vmem>>, vector<8x128xf32>,
    } else {
    }
    %c0_i32_6 = arith.constant 0 : i32
    %9 = arith.cmpi eq, %arg2, %c0_i32_6 : i32
    %10 = arith.extui %9 : i1 to i32
    %c0_i32_7 = arith.constant 0 : i32
    %11 = arith.cmpi ne, %10, %c0_i32_7 : i32
    scf.if %11 {
      %c0_8 = arith.constant 0 : index
      %c0_9 = arith.constant 0 : index
      %12 = vector.load %arg6[%c0_8, %c0_9] : memref<8x128xf32, #tpu.memory_space<vmem>>, vector<8x128xf32>
      %c0_10 = arith.constant 0 : index
      %c0_11 = arith.constant 0 : index
      %13 = vector.load %arg5[%c0_10, %c0_11] : memref<1x128xf32, #tpu.memory_space<vmem>>, vector<1x128xf32>
      %14 = vector.broadcast %13 : vector<1x128xf32> to vector<8x128xf32>
      %15 = arith.addf %12, %14 : vector<8x128xf32>
      %cst_12 = arith.constant 0.000000e+00 : f32
      %16 = vector.broadcast %cst_12 : f32 to vector<8x128xf32>
      %17 = arith.cmpf oge, %15, %16 : vector<8x128xf32>
      %cst_13 = arith.constant 2.000000e-01 : f32
      %18 = vector.broadcast %cst_13 : f32 to vector<8x128xf32>
      %19 = arith.mulf %18, %15 : vector<8x128xf32>
      %20 = arith.select %17, %15, %19 : vector<8x128xi1>, vector<8x128xf32>
      %c0_14 = arith.constant 0 : index
      %c0_15 = arith.constant 0 : index
      %21 = vector.load %arg6[%c0_14, %c0_15] : memref<8x128xf32, #tpu.memory_space<vmem>>, vector<8x128xf32>
      tpu.vector_store %arg6[%c0_14, %c0_15], %20 {strides = array<i32>} : memref<8x128xf32, #tpu.memory_space<vmem>>, vector<8x128xf32>,
    } else {
    }
    return
  }
  func.func @transform_0(%arg0: i32, %arg1: i32, %arg2: i32) -> (i32, i32) {
    %c0_i32 = arith.constant 0 : i32
    return %arg0, %arg2 : i32, i32
  }
  func.func @transform_1(%arg0: i32, %arg1: i32, %arg2: i32) -> (i32, i32) {
    %c0_i32 = arith.constant 0 : i32
    return %arg2, %arg1 : i32, i32
  }
  func.func @transform_2(%arg0: i32, %arg1: i32, %arg2: i32) -> (i32, i32) {
    %c0_i32 = arith.constant 0 : i32
    %c0_i32_0 = arith.constant 0 : i32
    return %c0_i32, %arg1 : i32, i32
  }
  func.func @transform_3(%arg0: i32, %arg1: i32, %arg2: i32) -> (i32, i32) {
    %c0_i32 = arith.constant 0 : i32
    return %arg0, %arg1 : i32, i32
  }
}

</mosaic_0001>

<llo_original>
// kernel: tpu_custom_call.1
$region0: #{tpu_custom_call.1}
  #allocation0 [shape = 'u32[]', space=smem, size = 0x4, offset = 0x4, fixed_abs, tag = 'smem constant byte address 0x4 - core index']
  #allocation1 [shape = 'u32[144,128]{1,0:T(1,128)}', space=vmem, size = 0x12000, scoped, tag = 'internal scratch']
  %s0 = inlined_call_operand.hbm [shape: f32[8,128], index: 0, kind: input, shape index: {}]
  %s1 = inlined_call_operand.hbm [shape: f32[128,128], index: 1, kind: input, shape index: {}]
  %s2 = inlined_call_operand.vmem [shape: f32[1,128], index: 2, kind: input, shape index: {}]
  %s3 = inlined_call_operand.hbm [shape: f32[8,128], index: 3, kind: output, shape index: {}]
  %s4 = sld [smem:[#allocation0]]
  $region42: #{tpu_custom_call.1} parent=0
    _
  %s6 = ssub.s32 1, %s4
  %s7 = scalar_select 0, %s6, %s4
  $region1: #{tpu_custom_call.1} parent=0
    #allocation2 [shape = 'u8[4096]{0}', space=vmem, size = 0x1000, scoped, tag = 'input window, operand 0, single buffered']
    #allocation3 [shape = 's32[1]{0}', space=sflag, size = 0x4, scoped, tag = 'scoped memory for tpu_custom_call.1']
    #allocation4 [shape = 's32[1]{0}', space=sflag, size = 0x4, scoped, tag = 'scoped memory for tpu_custom_call.1']
    #allocation5 [shape = 'u8[65536]{0}', space=vmem, size = 0x10000, scoped, tag = 'input window, operand 1, single buffered']
    #allocation6 [shape = 's32[1]{0}', space=sflag, size = 0x4, scoped, tag = 'scoped memory for tpu_custom_call.1']
    #allocation7 [shape = 'u8[4096]{0}', space=vmem, size = 0x1000, scoped, tag = 'output window, operand 0, single buffered']
    %8 = vsyncpa [#allocation3], 0
    %9 = vsyncpa [#allocation6], 0
    %10 = vsyncpa [#allocation4], 0
    // Predicated region
    $region2: #{tpu_custom_call.1} parent=1 // pred_check
      _
    $region3: #{tpu_custom_call.1} parent=1 // pred_check_branch
      %12 = sbr.rel (0) target = $region5
    $region4: #{tpu_custom_call.1} parent=1 // pred_region
      %s14 = ssub.s32 128, 128
      %15 = vsyncadd [#allocation3], %s14
      %s17 = sshll.u32 [#allocation2], 4
      %s18 = int_to_ptr.vmem [resolvable:$true] %s17
      %20 = dma.hbm_to_vmem [thread:$0]  %s0, 128, %s18, [#allocation3]
    $region5: #{tpu_custom_call.1} parent=1 // pred_fallthru
      _
    // Predicated region
    $region6: #{tpu_custom_call.1} parent=1 // pred_check
      _
    $region7: #{tpu_custom_call.1} parent=1 // pred_check_branch
      %22 = sbr.rel (0) target = $region9
    $region8: #{tpu_custom_call.1} parent=1 // pred_region
      %s24 = ssub.s32 2048, 2048
      %25 = vsyncadd [#allocation6], %s24
      %s26 = sshll.u32 [#allocation5], 4
      %s27 = int_to_ptr.vmem [resolvable:$true] %s26
      %32 = dma.hbm_to_vmem [thread:$0]  %s1, 2048, %s27, [#allocation6], 128, 128, 8
    $region9: #{tpu_custom_call.1} parent=1 // pred_fallthru
      _
    // Predicated region
    $region10: #{tpu_custom_call.1} parent=1 // pred_check
      _
    $region11: #{tpu_custom_call.1} parent=1 // pred_check_branch
      %34 = sbr.rel (0) target = $region13
    $region12: #{tpu_custom_call.1} parent=1 // pred_region
      _
    $region13: #{tpu_custom_call.1} parent=1 // pred_fallthru
      _
    // Predicated region
    $region14: #{tpu_custom_call.1} parent=1 // pred_check
      _
    $region15: #{tpu_custom_call.1} parent=1 // pred_check_branch
      %36 = sbr.rel (0) target = $region17
    $region16: #{tpu_custom_call.1} parent=1 // pred_region
      %37 = dma.done [#allocation3], 128
    $region17: #{tpu_custom_call.1} parent=1 // pred_fallthru
      _
    // Predicated region
    $region18: #{tpu_custom_call.1} parent=1 // pred_check
      _
    $region19: #{tpu_custom_call.1} parent=1 // pred_check_branch
      %39 = sbr.rel (0) target = $region21
    $region20: #{tpu_custom_call.1} parent=1 // pred_region
      %40 = dma.done [#allocation6], 2048
    $region21: #{tpu_custom_call.1} parent=1 // pred_fallthru
      _
    %v41 = vld [vmem:[#allocation2] sm:$0xff]
    %v42 = vld [vmem:[#allocation5] sm:$0xff]
    %v43 = vld [vmem:[#allocation5 + $0x8] sm:$0xff]
    %v44 = vld [vmem:[#allocation5 + $0x10] sm:$0xff]
    %v45 = vld [vmem:[#allocation5 + $0x18] sm:$0xff]
    %v46 = vld [vmem:[#allocation5 + $0x20] sm:$0xff]
    %v47 = vld [vmem:[#allocation5 + $0x28] sm:$0xff]
    %v48 = vld [vmem:[#allocation5 + $0x30] sm:$0xff]
    %v49 = vld [vmem:[#allocation5 + $0x38] sm:$0xff]
    %v50 = vld [vmem:[#allocation5 + $0x40] sm:$0xff]
    %v51 = vld [vmem:[#allocation5 + $0x48] sm:$0xff]
    %v52 = vld [vmem:[#allocation5 + $0x50] sm:$0xff]
    %v53 = vld [vmem:[#allocation5 + $0x58] sm:$0xff]
    %v54 = vld [vmem:[#allocation5 + $0x60] sm:$0xff]
    %v55 = vld [vmem:[#allocation5 + $0x68] sm:$0xff]
    %v56 = vld [vmem:[#allocation5 + $0x70] sm:$0xff]
    %v57 = vld [vmem:[#allocation5 + $0x78] sm:$0xff]
    %58 = vmatprep.subr.mxu0 0.0
    %59 = vmatpush1.msra.mxu0 %v57
    %60 = vmatprep.subr.mxu0 0.0
    %61 = vmatpush1.msra.mxu0 %v56
    %62 = vmatprep.subr.mxu0 0.0
    %63 = vmatpush1.msra.mxu0 %v55
    %64 = vmatprep.subr.mxu0 0.0
    %65 = vmatpush1.msra.mxu0 %v54
    %66 = vmatprep.subr.mxu0 0.0
    %67 = vmatpush1.msra.mxu0 %v53
    %68 = vmatprep.subr.mxu0 0.0
    %69 = vmatpush1.msra.mxu0 %v52
    %70 = vmatprep.subr.mxu0 0.0
    %71 = vmatpush1.msra.mxu0 %v51
    %72 = vmatprep.subr.mxu0 0.0
    %73 = vmatpush1.msra.mxu0 %v50
    %74 = vmatprep.subr.mxu0 0.0
    %75 = vmatpush1.msra.mxu0 %v49
    %76 = vmatprep.subr.mxu0 0.0
    %77 = vmatpush1.msra.mxu0 %v48
    %78 = vmatprep.subr.mxu0 0.0
    %79 = vmatpush1.msra.mxu0 %v47
    %80 = vmatprep.subr.mxu0 0.0
    %81 = vmatpush1.msra.mxu0 %v46
    %82 = vmatprep.subr.mxu0 0.0
    %83 = vmatpush1.msra.mxu0 %v45
    %84 = vmatprep.subr.mxu0 0.0
    %85 = vmatpush1.msra.mxu0 %v44
    %86 = vmatprep.subr.mxu0 0.0
    %87 = vmatpush1.msra.mxu0 %v43
    %88 = vmatprep.subr.mxu0 0.0
    %89 = vmatpush1.msra.mxu0 %v42
    %90 = vmatprep.subr.mxu0 0.0
    %91 = vmatpush2.msra.mxu0 0.0
    %92 = vmatprep.subr.mxu0 0.0
    %93 = vmatpush2.msra.mxu0 0.0
    %94 = vmatprep.subr.mxu0 0.0
    %95 = vmatpush2.msra.mxu0 0.0
    %96 = vmatprep.subr.mxu0 0.0
    %97 = vmatpush2.msra.mxu0 0.0
    %98 = vmatprep.subr.mxu0 0.0
    %99 = vmatpush2.msra.mxu0 0.0
    %100 = vmatprep.subr.mxu0 0.0
    %101 = vmatpush2.msra.mxu0 0.0
    %102 = vmatprep.subr.mxu0 0.0
    %103 = vmatpush2.msra.mxu0 0.0
    %104 = vmatprep.subr.mxu0 0.0
    %105 = vmatpush2.msra.mxu0 0.0
    %106 = vmatprep.subr.mxu0 0.0
    %107 = vmatpush2.msra.mxu0 0.0
    %108 = vmatprep.subr.mxu0 0.0
    %109 = vmatpush2.msra.mxu0 0.0
    %110 = vmatprep.subr.mxu0 0.0
    %111 = vmatpush2.msra.mxu0 0.0
    %112 = vmatprep.subr.mxu0 0.0
    %113 = vmatpush2.msra.mxu0 0.0
    %114 = vmatprep.subr.mxu0 0.0
    %115 = vmatpush2.msra.mxu0 0.0
    %116 = vmatprep.subr.mxu0 0.0
    %117 = vmatpush2.msra.mxu0 0.0
    %118 = vmatprep.subr.mxu0 0.0
    %119 = vmatpush2.msra.mxu0 0.0
    %120 = vmatprep.subr.mxu0 0.0
    %121 = vmatpush2.msra.mxu0 0.0
    %122 = vmatprep.mubr.f32.mxu0 0.0
    %123 = vmatmul.mubr.f32.gmra.mxu0 %v41
    %v124 = vpop.f32.mrf.mxu0
    %v125 = vadd.f32 0.0, %v124
    %v126 = vpop.f32.mrf.mxu0
    %127 = vdwg.mxu0
    %p128 = scmp.eq.s32.totalorder 0, 0
    // Predicated region
    $region22: #{tpu_custom_call.1} parent=1 // pred_check
      %p129 = pneg %p128
    $region23: #{tpu_custom_call.1} parent=1 // pred_check_branch
      %131 = sbr.rel (%p129) target = $region25
    $region24: #{tpu_custom_call.1} parent=1 // pred_region
      %132 = vst [vmem:[#allocation7] sm:$0xff] %v125
    $region25: #{tpu_custom_call.1} parent=1 // pred_fallthru
      _
    %p133 = scmp.gt.s32.totalorder 0, 0
    // Predicated region
    $region26: #{tpu_custom_call.1} parent=1 // pred_check
      %p134 = pneg %p133
    $region27: #{tpu_custom_call.1} parent=1 // pred_check_branch
      %136 = sbr.rel (%p134) target = $region29
    $region28: #{tpu_custom_call.1} parent=1 // pred_region
      %v137 = vld [vmem:[#allocation7] sm:$0xff]
      %v138 = vadd.f32 %v137, %v125
      %139 = vst [vmem:[#allocation7] sm:$0xff] %v138
    $region29: #{tpu_custom_call.1} parent=1 // pred_fallthru
      _
    // Predicated region
    $region30: #{tpu_custom_call.1} parent=1 // pred_check
      %p140 = pneg %p128
    $region31: #{tpu_custom_call.1} parent=1 // pred_check_branch
      %142 = sbr.rel (%p140) target = $region33
    $region32: #{tpu_custom_call.1} parent=1 // pred_region
      %v143 = vld [vmem:[#allocation7] sm:$0xff]
      %v144 = vld [vmem:[%s2] sm:$0x1]
      %v146 = vlaneseq
      %v147 = vshrl.u32 %v146, 7
      %v148 = vsub.s32 0, %v147
      %v149 = vrot.slane %v144, %v148
      %v151 = vadd.f32 %v143, %v149
      %vm152 = vcmp.ge.f32.partialorder %v151, 0.0
      %v153 = vmul.f32 %v151, 0.2
      %v154 = vsel %vm152, %v151, %v153
      %155 = vst [vmem:[#allocation7] sm:$0xff] %v154
    $region33: #{tpu_custom_call.1} parent=1 // pred_fallthru
      _
    // Predicated region
    $region34: #{tpu_custom_call.1} parent=1 // pred_check
      _
    $region35: #{tpu_custom_call.1} parent=1 // pred_check_branch
      %157 = sbr.rel (0) target = $region37
    $region36: #{tpu_custom_call.1} parent=1 // pred_region
      %s159 = ssub.s32 128, 128
      %160 = vsyncadd [#allocation4], %s159
      %s162 = sshll.u32 [#allocation7], 4
      %s163 = int_to_ptr.vmem [resolvable:$true] %s162
      %165 = dma.vmem_to_hbm [thread:$0]  %s163, 128, %s3, [#allocation4]
    $region37: #{tpu_custom_call.1} parent=1 // pred_fallthru
      _
    // Predicated region
    $region38: #{tpu_custom_call.1} parent=1 // pred_check
      _
    $region39: #{tpu_custom_call.1} parent=1 // pred_check_branch
      %167 = sbr.rel (0) target = $region41
    $region40: #{tpu_custom_call.1} parent=1 // pred_region
      %168 = dma.done [#allocation4], 128
    $region41: #{tpu_custom_call.1} parent=1 // pred_fallthru
      _
    %169 = vsyncpa [#allocation3], 1
    %170 = vsyncpa [#allocation6], 1
    %171 = vsyncpa [#allocation4], 1

</llo_original>
